<compile_context>
chip_gen: v7x
topology: tpu7x:2x2x1
jax: 0.10.0
libtpu: 0.0.40
codegen_flags: <defaults>
</compile_context>

<pallas_src>
import jax
import jax.numpy as jnp
from jax.experimental import pallas as pl
from jax.experimental.pallas import tpu as pltpu


# ----------------------------- small helpers --------------------------------

def _round_up(x, m):
    return (x + m - 1) // m * m


def _cdiv(a, b):
    return -(-a // b)


def _vmem_capacity_bytes():
    """Per-generation VMEM capacity; conservative fallback if the query fails."""
    try:
        return int(pltpu.get_tpu_info().vmem_capacity_bytes)
    except Exception:
        return 64 << 20        # v7x per-core VMEM (smallest across gens)


def _choose_tile_m(n_rows, requested):
    """Row tile: MXU-height aligned (256), >=4 grid steps (2 per v7x TensorCore)
    when the row count allows, with minimal padding."""
    if n_rows <= 256:
        return max(8, _round_up(n_rows, 8))
    req = max(256, _round_up(requested, 256))
    n_tiles256 = _cdiv(n_rows, 256)
    steps = min(max(4, _cdiv(n_rows, req)), n_tiles256)
    return _cdiv(n_tiles256, steps) * 256


def _resident_bytes(tm, d, th, xbytes, wbytes, *, act_bufs=2, w_bufs=1):
    """Rough per-step VMEM footprint for the chosen tiling."""
    act = 2 * act_bufs * tm * d * xbytes                 # x tile + out tile
    wts = w_bufs * 2 * d * th * wbytes                   # W1 tile + W2 tile
    vecs = w_bufs * th * 4 + 3 * d * 4                   # b1 tile, b2/gamma/beta
    inter = tm * th * (4 + wbytes) + 2 * tm * d * 4      # h (f32 + bf16), y/acc
    return act + wts + vecs + inter


def _spec(shape, index_map, bufs=None):
    if bufs is None:
        return pl.BlockSpec(shape, index_map)
    return pl.BlockSpec(shape, index_map, pipeline_mode=pl.Buffered(bufs))


# ------------------------------- kernels ------------------------------------

def _layer_norm(y, gamma, beta, eps=1e-5):
    mu = jnp.mean(y, axis=-1, keepdims=True)
    diff = y - mu
    var = jnp.mean(diff * diff, axis=-1, keepdims=True)
    return diff * jax.lax.rsqrt(var + eps) * gamma + beta


def ffn_kernel(x_ref, w1_ref, b1_ref, w2_ref, b2_ref, gamma_ref, beta_ref, o_ref):
    """Single-step path: full hidden dim resident in VMEM."""
    # Linear1 + ReLU: bf16 MXU matmul, f32 accumulate; bias/ReLU on VPU in f32.
    h = jnp.dot(x_ref[...].astype(w1_ref.dtype), w1_ref[...],
                preferred_element_type=jnp.float32)
    h = jnp.maximum(h + b1_ref[...], 0.0)
    # Linear2 + bias + residual; re-read x from the resident VMEM block instead
    # of keeping an f32 copy live across both matmuls.
    y = jnp.dot(h.astype(w2_ref.dtype), w2_ref[...],
                preferred_element_type=jnp.float32)
    y = y + b2_ref[...] + x_ref[...].astype(jnp.float32)
    o_ref[...] = _layer_norm(y, gamma_ref[...], beta_ref[...]).astype(o_ref.dtype)


def ffn_kernel_hsplit(x_ref, w1_ref, b1_ref, w2_ref, b2_ref, gamma_ref, beta_ref,
                      o_ref, acc_ref):
    """H-split path: grid = (row tiles [parallel], hidden tiles [arbitrary]).
    The second matmul accumulates into a (tm, D) f32 scratch; bias, residual and
    LayerNorm are applied on the last hidden step."""
    hi = pl.program_id(1)

    @pl.when(hi == 0)
    def _():
        acc_ref[...] = jnp.zeros_like(acc_ref)

    h = jnp.dot(x_ref[...].astype(w1_ref.dtype), w1_ref[...],
                preferred_element_type=jnp.float32)
    h = jnp.maximum(h + b1_ref[...], 0.0)
    acc_ref[...] += jnp.dot(h.astype(w2_ref.dtype), w2_ref[...],
                            preferred_element_type=jnp.float32)

    @pl.when(hi == pl.num_programs(1) - 1)
    def _():
        y = acc_ref[...] + b2_ref[...] + x_ref[...].astype(jnp.float32)
        o_ref[...] = _layer_norm(y, gamma_ref[...], beta_ref[...]).astype(o_ref.dtype)


# ------------------------------- wrappers ------------------------------------

def prepare_ffn_params(w1, b1, w2, b2, gamma, beta, *, compute_dtype=jnp.bfloat16):
    """Cast / lay out parameters ONCE, outside the per-call path: weights go to
    the MXU compute dtype; per-feature vectors stay f32 as (1, K) lane-dense rows."""
    d, h = w1.shape
    return (w1.astype(compute_dtype),
            b1.astype(jnp.float32).reshape(1, h),
            w2.astype(compute_dtype),
            b2.astype(jnp.float32).reshape(1, d),
            gamma.astype(jnp.float32).reshape(1, d),
            beta.astype(jnp.float32).reshape(1, d))


def feed_forward_network(x, w1, b1, w2, b2, gamma, beta, *, tile_m=512):
    """x: [..., D] -> same shape/dtype.  Parameters must come from
    `prepare_ffn_params` (weights already in the MXU compute dtype)."""
    orig_shape = x.shape
    D = orig_shape[-1]
    H = w1.shape[1]
    xbytes = x.dtype.itemsize
    wbytes = w1.dtype.itemsize

    x2 = x.reshape(-1, D)
    n_rows = x2.shape[0]

    # ---- tiling: fit the resident footprint into a generation-aware budget ----
    cap = _vmem_capacity_bytes()
    budget = int(cap * 0.75)
    tm = _choose_tile_m(n_rows, tile_m)
    th = H
    while _resident_bytes(tm, D, th, xbytes, wbytes,
                          w_bufs=1 if th == H else 2) > budget:
        if th > 128 and (th // 2) % 128 == 0:
            th //= 2                                     # split the hidden dim
        elif tm > 256:
            tm = max(256, _round_up(tm // 2, 256))
        elif tm > 8:
            tm = max(8, _round_up(tm // 2, 8))
        else:
            break                                        # smallest config

    n_pad = _round_up(n_rows, tm)
    if n_pad != n_rows:                                  # pad rows, never assert
        x2 = jnp.pad(x2, ((0, n_pad - n_rows), (0, 0)))
    m_steps = n_pad // tm

    # Deeper activation buffering when it is free (128 MiB parts / small D).
    act_bufs = None
    if th == H and m_steps >= 3 and _resident_bytes(
            tm, D, th, xbytes, wbytes, act_bufs=3, w_bufs=1) <= budget:
        act_bufs = 3

    need = _resident_bytes(tm, D, th, xbytes, wbytes,
                           act_bufs=(act_bufs or 2),
                           w_bufs=1 if th == H else 2)
    vmem_limit = int(min(max(2 * need, 32 << 20), int(cap * 0.9)))

    cost = pl.CostEstimate(
        flops=int(4 * n_pad * D * H),                    # two matmuls, 2 flops/MAC
        transcendentals=int(n_pad),                      # one rsqrt per row
        bytes_accessed=int(2 * n_pad * D * xbytes + 2 * D * H * wbytes
                           + (3 * D + H) * 4),
    )

    if th == H:
        grid = (m_steps,)
        in_specs = [
            _spec((tm, D), lambda i: (i, 0), act_bufs),   # x row tile
            _spec((D, H), lambda i: (0, 0), 1),           # W1 (VMEM-resident)
            _spec((1, H), lambda i: (0, 0), 1),           # b1
            _spec((H, D), lambda i: (0, 0), 1),           # W2 (VMEM-resident)
            _spec((1, D), lambda i: (0, 0), 1),           # b2
            _spec((1, D), lambda i: (0, 0), 1),           # gamma
            _spec((1, D), lambda i: (0, 0), 1),           # beta
        ]
        out_specs = _spec((tm, D), lambda i: (i, 0), act_bufs)
        kernel = ffn_kernel
        scratch = []
        dims = ("parallel",)
    else:
        grid = (m_steps, H // th)                         # reduction axis last
        in_specs = [
            _spec((tm, D), lambda i, k: (i, 0)),          # x (constant over k)
            _spec((D, th), lambda i, k: (0, k)),          # W1 column tile
            _spec((1, th), lambda i, k: (0, k)),          # b1 tile
            _spec((th, D), lambda i, k: (k, 0)),          # W2 row tile
            _spec((1, D), lambda i, k: (0, 0), 1),        # b2
            _spec((1, D), lambda i, k: (0, 0), 1),        # gamma
            _spec((1, D), lambda i, k: (0, 0), 1),        # beta
        ]
        out_specs = _spec((tm, D), lambda i, k: (i, 0))
        kernel = ffn_kernel_hsplit
        scratch = [pltpu.VMEM((tm, D), jnp.float32)]
        dims = ("parallel", "arbitrary")

    out = pl.pallas_call(
        kernel,
        out_shape=jax.ShapeDtypeStruct((n_pad, D), x.dtype),
        grid_spec=pltpu.PrefetchScalarGridSpec(
            num_scalar_prefetch=0,
            grid=grid,
            in_specs=in_specs,
            out_specs=out_specs,
            scratch_shapes=scratch),
        compiler_params=pltpu.CompilerParams(
            dimension_semantics=dims,
            vmem_limit_bytes=vmem_limit),
        cost_estimate=cost,
    )(x2, w1, b1, w2, b2, gamma, beta)

    return out[:n_rows].reshape(orig_shape)


def init_params(key, input_dim, hidden_dim):
    """Deterministic init mirroring nn.Linear / nn.LayerNorm parameter shapes."""
    k1, k2, k3, k4 = jax.random.split(key, 4)
    lim1 = 1.0 / (input_dim ** 0.5)
    lim2 = 1.0 / (hidden_dim ** 0.5)
    # Stored as [in, out] so the kernel does x @ W (== torch's x @ W.T).
    w1 = jax.random.uniform(k1, (input_dim, hidden_dim), jnp.float32, -lim1, lim1)
    b1 = jax.random.uniform(k2, (hidden_dim,), jnp.float32, -lim1, lim1)
    w2 = jax.random.uniform(k3, (hidden_dim, input_dim), jnp.float32, -lim2, lim2)
    b2 = jax.random.uniform(k4, (input_dim,), jnp.float32, -lim2, lim2)
    gamma = jnp.ones((input_dim,), jnp.float32)
    beta = jnp.zeros((input_dim,), jnp.float32)
    return w1, b1, w2, b2, gamma, beta


if __name__ == "__main__":
    batch, seq, input_dim = 2, 8, 128           # D multiple of 128 -> lane-dense I/O
    hidden_dim = 4 * input_dim                  # PyTorch default

    key = jax.random.PRNGKey(0)
    kx, kp = jax.random.split(key)
    x = jax.random.normal(kx, (batch, seq, input_dim), jnp.float32)
    w1, b1, w2, b2, gamma, beta = init_params(kp, input_dim, hidden_dim)

    # Weight cast / layout hoisted out of the per-call path (done once).
    params = prepare_ffn_params(w1, b1, w2, b2, gamma, beta)

    out = feed_forward_network(x, *params)
    out = jax.block_until_ready(out)

    # Pure-JAX reference of the same math (bf16 matmul inputs, f32 accumulation,
    # f32 bias/residual/LayerNorm) to validate the kernel.
    bf = lambda a: a.astype(jnp.bfloat16).astype(jnp.float32)
    h_ref = jnp.maximum(bf(x) @ bf(w1) + b1, 0.0)
    y_ref = bf(h_ref) @ bf(w2) + b2 + x
    mu = jnp.mean(y_ref, axis=-1, keepdims=True)
    var = jnp.mean((y_ref - mu) ** 2, axis=-1, keepdims=True)
    ref = (y_ref - mu) * jax.lax.rsqrt(var + 1e-5) * gamma + beta
    assert jnp.allclose(out, ref, atol=2e-3, rtol=2e-3), "mismatch vs reference"

    print("KERNEL_OK")
</pallas_src>

<mosaic_0001>
module attributes {stable_mosaic.version = 11 : i64} {
  func.func @ffn_kernel(%arg0: i32, %arg1: memref<16x128xf32, #tpu.memory_space<vmem>>, %arg2: memref<128x512xbf16, #tpu.memory_space<vmem>>, %arg3: memref<1x512xf32, #tpu.memory_space<vmem>>, %arg4: memref<512x128xbf16, #tpu.memory_space<vmem>>, %arg5: memref<1x128xf32, #tpu.memory_space<vmem>>, %arg6: memref<1x128xf32, #tpu.memory_space<vmem>>, %arg7: memref<1x128xf32, #tpu.memory_space<vmem>>, %arg8: memref<16x128xf32, #tpu.memory_space<vmem>>) attributes {dimension_semantics = [#tpu.dimension_semantics<parallel>], iteration_bounds = array<i64: 1>, scalar_prefetch = 0 : i64, scratch_operands = 0 : i64, tpu.core_type = #tpu.core_type<tc>, window_params = [{transform_indices = @transform_0, window_bounds = array<i64: 16, 128>}, {pipeline_mode = #tpu.pipeline_mode<synchronous>, transform_indices = @transform_1, window_bounds = array<i64: 128, 512>}, {pipeline_mode = #tpu.pipeline_mode<synchronous>, transform_indices = @transform_2, window_bounds = array<i64: 1, 512>}, {pipeline_mode = #tpu.pipeline_mode<synchronous>, transform_indices = @transform_3, window_bounds = array<i64: 512, 128>}, {pipeline_mode = #tpu.pipeline_mode<synchronous>, transform_indices = @transform_4, window_bounds = array<i64: 1, 128>}, {pipeline_mode = #tpu.pipeline_mode<synchronous>, transform_indices = @transform_5, window_bounds = array<i64: 1, 128>}, {pipeline_mode = #tpu.pipeline_mode<synchronous>, transform_indices = @transform_6, window_bounds = array<i64: 1, 128>}, {transform_indices = @transform_7, window_bounds = array<i64: 16, 128>}]} {
    %c0 = arith.constant 0 : index
    %c0_0 = arith.constant 0 : index
    %0 = vector.load %arg1[%c0, %c0_0] : memref<16x128xf32, #tpu.memory_space<vmem>>, vector<16x128xf32>
    %1 = arith.truncf %0 : vector<16x128xf32> to vector<16x128xbf16>
    %c0_1 = arith.constant 0 : index
    %c0_2 = arith.constant 0 : index
    %2 = vector.load %arg2[%c0_1, %c0_2] : memref<128x512xbf16, #tpu.memory_space<vmem>>, vector<128x512xbf16>
    %cst = arith.constant dense<0.000000e+00> : vector<16x512xf32>
    %3 = tpu.matmul %1, %2, %cst {dimension_numbers = #tpu.dot_dimension_numbers<[1], [0], [0], [1], [0, 0, 1, 1], [], []>} : vector<16x128xbf16>, vector<128x512xbf16>, vector<16x512xf32> -> vector<16x512xf32>
    %c0_3 = arith.constant 0 : index
    %c0_4 = arith.constant 0 : index
    %4 = vector.load %arg3[%c0_3, %c0_4] : memref<1x512xf32, #tpu.memory_space<vmem>>, vector<1x512xf32>
    %5 = vector.broadcast %4 : vector<1x512xf32> to vector<16x512xf32>
    %6 = arith.addf %3, %5 : vector<16x512xf32>
    %cst_5 = arith.constant 0.000000e+00 : f32
    %7 = vector.broadcast %cst_5 : f32 to vector<16x512xf32>
    %8 = arith.maximumf %6, %7 : vector<16x512xf32>
    %9 = arith.truncf %8 : vector<16x512xf32> to vector<16x512xbf16>
    %c0_6 = arith.constant 0 : index
    %c0_7 = arith.constant 0 : index
    %10 = vector.load %arg4[%c0_6, %c0_7] : memref<512x128xbf16, #tpu.memory_space<vmem>>, vector<512x128xbf16>
    %cst_8 = arith.constant dense<0.000000e+00> : vector<16x128xf32>
    %11 = tpu.matmul %9, %10, %cst_8 {dimension_numbers = #tpu.dot_dimension_numbers<[1], [0], [0], [1], [0, 0, 1, 1], [], []>} : vector<16x512xbf16>, vector<512x128xbf16>, vector<16x128xf32> -> vector<16x128xf32>
    %c0_9 = arith.constant 0 : index
    %c0_10 = arith.constant 0 : index
    %12 = vector.load %arg5[%c0_9, %c0_10] : memref<1x128xf32, #tpu.memory_space<vmem>>, vector<1x128xf32>
    %13 = vector.broadcast %12 : vector<1x128xf32> to vector<16x128xf32>
    %14 = arith.addf %11, %13 : vector<16x128xf32>
    %c0_11 = arith.constant 0 : index
    %c0_12 = arith.constant 0 : index
    %15 = vector.load %arg1[%c0_11, %c0_12] : memref<16x128xf32, #tpu.memory_space<vmem>>, vector<16x128xf32>
    %16 = arith.addf %14, %15 : vector<16x128xf32>
    %c0_13 = arith.constant 0 : index
    %c0_14 = arith.constant 0 : index
    %17 = vector.load %arg6[%c0_13, %c0_14] : memref<1x128xf32, #tpu.memory_space<vmem>>, vector<1x128xf32>
    %c0_15 = arith.constant 0 : index
    %c0_16 = arith.constant 0 : index
    %18 = vector.load %arg7[%c0_15, %c0_16] : memref<1x128xf32, #tpu.memory_space<vmem>>, vector<1x128xf32>
    %cst_17 = arith.constant dense<0.000000e+00> : vector<16xf32>
    %19 = vector.multi_reduction <add>, %16, %cst_17 [1] : vector<16x128xf32> to vector<16xf32>
    %20 = vector.shape_cast %19 : vector<16xf32> to vector<16x1xf32>
    %cst_18 = arith.constant 1.280000e+02 : f32
    %21 = vector.broadcast %cst_18 : f32 to vector<16x1xf32>
    %22 = arith.divf %20, %21 : vector<16x1xf32>
    %23 = vector.broadcast %22 : vector<16x1xf32> to vector<16x128xf32>
    %24 = arith.subf %16, %23 : vector<16x128xf32>
    %25 = arith.mulf %24, %24 : vector<16x128xf32>
    %cst_19 = arith.constant dense<0.000000e+00> : vector<16xf32>
    %26 = vector.multi_reduction <add>, %25, %cst_19 [1] : vector<16x128xf32> to vector<16xf32>
    %27 = vector.shape_cast %26 : vector<16xf32> to vector<16x1xf32>
    %cst_20 = arith.constant 1.280000e+02 : f32
    %28 = vector.broadcast %cst_20 : f32 to vector<16x1xf32>
    %29 = arith.divf %27, %28 : vector<16x1xf32>
    %cst_21 = arith.constant 9.99999974E-6 : f32
    %30 = vector.broadcast %cst_21 : f32 to vector<16x1xf32>
    %31 = arith.addf %29, %30 : vector<16x1xf32>
    %32 = math.rsqrt %31 : vector<16x1xf32>
    %33 = vector.broadcast %32 : vector<16x1xf32> to vector<16x128xf32>
    %34 = arith.mulf %24, %33 : vector<16x128xf32>
    %35 = vector.broadcast %17 : vector<1x128xf32> to vector<16x128xf32>
    %36 = arith.mulf %34, %35 : vector<16x128xf32>
    %37 = vector.broadcast %18 : vector<1x128xf32> to vector<16x128xf32>
    %38 = arith.addf %36, %37 : vector<16x128xf32>
    %c0_22 = arith.constant 0 : index
    %c0_23 = arith.constant 0 : index
    %39 = vector.load %arg8[%c0_22, %c0_23] : memref<16x128xf32, #tpu.memory_space<vmem>>, vector<16x128xf32>
    tpu.vector_store %arg8[%c0_22, %c0_23], %38 {strides = array<i32>} : memref<16x128xf32, #tpu.memory_space<vmem>>, vector<16x128xf32>,
    return
  }
  func.func @transform_0(%arg0: i32) -> (i32, i32) {
    %c0_i32 = arith.constant 0 : i32
    %c0_i32_0 = arith.constant 0 : i32
    return %arg0, %c0_i32 : i32, i32
  }
  func.func @transform_1(%arg0: i32) -> (i32, i32) {
    %c0_i32 = arith.constant 0 : i32
    %c0_i32_0 = arith.constant 0 : i32
    %c0_i32_1 = arith.constant 0 : i32
    return %c0_i32, %c0_i32_0 : i32, i32
  }
  func.func @transform_2(%arg0: i32) -> (i32, i32) {
    %c0_i32 = arith.constant 0 : i32
    %c0_i32_0 = arith.constant 0 : i32
    %c0_i32_1 = arith.constant 0 : i32
    return %c0_i32, %c0_i32_0 : i32, i32
  }
  func.func @transform_3(%arg0: i32) -> (i32, i32) {
    %c0_i32 = arith.constant 0 : i32
    %c0_i32_0 = arith.constant 0 : i32
    %c0_i32_1 = arith.constant 0 : i32
    return %c0_i32, %c0_i32_0 : i32, i32
  }
  func.func @transform_4(%arg0: i32) -> (i32, i32) {
    %c0_i32 = arith.constant 0 : i32
    %c0_i32_0 = arith.constant 0 : i32
    %c0_i32_1 = arith.constant 0 : i32
    return %c0_i32, %c0_i32_0 : i32, i32
  }
  func.func @transform_5(%arg0: i32) -> (i32, i32) {
    %c0_i32 = arith.constant 0 : i32
    %c0_i32_0 = arith.constant 0 : i32
    %c0_i32_1 = arith.constant 0 : i32
    return %c0_i32, %c0_i32_0 : i32, i32
  }
  func.func @transform_6(%arg0: i32) -> (i32, i32) {
    %c0_i32 = arith.constant 0 : i32
    %c0_i32_0 = arith.constant 0 : i32
    %c0_i32_1 = arith.constant 0 : i32
    return %c0_i32, %c0_i32_0 : i32, i32
  }
  func.func @transform_7(%arg0: i32) -> (i32, i32) {
    %c0_i32 = arith.constant 0 : i32
    %c0_i32_0 = arith.constant 0 : i32
    return %arg0, %c0_i32 : i32, i32
  }
}

</mosaic_0001>

<llo_original>
// kernel: tpu_custom_call.1
$region0: #{tpu_custom_call.1}
  #allocation0 [shape = 'u32[]', space=smem, size = 0x4, offset = 0x4, fixed_abs, tag = 'smem constant byte address 0x4 - core index']
  #allocation1 [shape = 'u32[144,128]{1,0:T(1,128)}', space=vmem, size = 0x12000, scoped, tag = 'internal scratch']
  %s0 = inlined_call_operand.hbm [shape: f32[16,128], index: 0, kind: input, shape index: {}]
  %s1 = inlined_call_operand.hbm [shape: bf16[128,512], index: 1, kind: input, shape index: {}]
  %s2 = inlined_call_operand.vmem [shape: f32[1,512], index: 2, kind: input, shape index: {}]
  %s3 = inlined_call_operand.hbm [shape: bf16[512,128], index: 3, kind: input, shape index: {}]
  %s4 = inlined_call_operand.vmem [shape: f32[1,128], index: 4, kind: input, shape index: {}]
  %s5 = inlined_call_operand.vmem [shape: f32[1,128], index: 5, kind: input, shape index: {}]
  %s6 = inlined_call_operand.vmem [shape: f32[1,128], index: 6, kind: input, shape index: {}]
  %s7 = inlined_call_operand.hbm [shape: f32[16,128], index: 7, kind: output, shape index: {}]
  %s8 = sld [smem:[#allocation0]]
  $region50: #{tpu_custom_call.1} parent=0
    _
  %s10 = ssub.s32 1, %s8
  %s11 = scalar_select 0, %s10, %s8
  $region1: #{tpu_custom_call.1} parent=0
    #allocation2 [shape = 'u8[8192]{0}', space=vmem, size = 0x2000, scoped, tag = 'input window, operand 0, single buffered']
    #allocation3 [shape = 's32[1]{0}', space=sflag, size = 0x4, scoped, tag = 'scoped memory for tpu_custom_call.1']
    #allocation4 [shape = 's32[1]{0}', space=sflag, size = 0x4, scoped, tag = 'scoped memory for tpu_custom_call.1']
    #allocation5 [shape = 'u8[131072]{0}', space=vmem, size = 0x20000, scoped, tag = 'input window, operand 1, single buffered']
    #allocation6 [shape = 's32[1]{0}', space=sflag, size = 0x4, scoped, tag = 'scoped memory for tpu_custom_call.1']
    #allocation7 [shape = 'u8[131072]{0}', space=vmem, size = 0x20000, scoped, tag = 'input window, operand 3, single buffered']
    #allocation8 [shape = 'u8[8192]{0}', space=vmem, size = 0x2000, scoped, tag = 'output window, operand 0, single buffered']
    %12 = vsyncpa [#allocation3], 0
    %13 = vsyncpa [#allocation6], 0
    %14 = vsyncpa [#allocation4], 0
    // Predicated region
    $region2: #{tpu_custom_call.1} parent=1 // pred_check
      _
    $region3: #{tpu_custom_call.1} parent=1 // pred_check_branch
      %16 = sbr.rel (0) target = $region5
    $region4: #{tpu_custom_call.1} parent=1 // pred_region
      %s18 = ssub.s32 256, 256
      %19 = vsyncadd [#allocation3], %s18
      %s20 = sshll.u32 [#allocation2], 4
      %s21 = int_to_ptr.vmem [resolvable:$true] %s20
      %26 = dma.hbm_to_vmem [thread:$0]  %s0, 256, %s21, [#allocation3], 128, 128, 8
    $region5: #{tpu_custom_call.1} parent=1 // pred_fallthru
      _
    // Predicated region
    $region6: #{tpu_custom_call.1} parent=1 // pred_check
      _
    $region7: #{tpu_custom_call.1} parent=1 // pred_check_branch
      %28 = sbr.rel (0) target = $region9
    $region8: #{tpu_custom_call.1} parent=1 // pred_region
      %s30 = ssub.s32 4096, 4096
      %31 = vsyncadd [#allocation6], %s30
      %s32 = sshll.u32 [#allocation5], 4
      %s33 = int_to_ptr.vmem [resolvable:$true] %s32
      %38 = dma.hbm_to_vmem [thread:$0]  %s1, 4096, %s33, [#allocation6], 256, 256, 16
    $region9: #{tpu_custom_call.1} parent=1 // pred_fallthru
      _
    // Predicated region
    $region10: #{tpu_custom_call.1} parent=1 // pred_check
      _
    $region11: #{tpu_custom_call.1} parent=1 // pred_check_branch
      %40 = sbr.rel (0) target = $region13
    $region12: #{tpu_custom_call.1} parent=1 // pred_region
      _
    $region13: #{tpu_custom_call.1} parent=1 // pred_fallthru
      _
    // Predicated region
    $region14: #{tpu_custom_call.1} parent=1 // pred_check
      _
    $region15: #{tpu_custom_call.1} parent=1 // pred_check_branch
      %42 = sbr.rel (0) target = $region17
    $region16: #{tpu_custom_call.1} parent=1 // pred_region
      %s44 = ssub.s32 4096, 4096
      %45 = vsyncadd [#allocation6], %s44
      %s46 = sshll.u32 [#allocation7], 4
      %s47 = int_to_ptr.vmem [resolvable:$true] %s46
      %52 = dma.hbm_to_vmem [thread:$0]  %s3, 4096, %s47, [#allocation6], 64, 64, 4
    $region17: #{tpu_custom_call.1} parent=1 // pred_fallthru
      _
    // Predicated region
    $region18: #{tpu_custom_call.1} parent=1 // pred_check
      _
    $region19: #{tpu_custom_call.1} parent=1 // pred_check_branch
      %54 = sbr.rel (0) target = $region21
    $region20: #{tpu_custom_call.1} parent=1 // pred_region
      _
    $region21: #{tpu_custom_call.1} parent=1 // pred_fallthru
      _
    // Predicated region
    $region22: #{tpu_custom_call.1} parent=1 // pred_check
      _
    $region23: #{tpu_custom_call.1} parent=1 // pred_check_branch
      %56 = sbr.rel (0) target = $region25
    $region24: #{tpu_custom_call.1} parent=1 // pred_region
      _
    $region25: #{tpu_custom_call.1} parent=1 // pred_fallthru
      _
    // Predicated region
    $region26: #{tpu_custom_call.1} parent=1 // pred_check
      _
    $region27: #{tpu_custom_call.1} parent=1 // pred_check_branch
      %58 = sbr.rel (0) target = $region29
    $region28: #{tpu_custom_call.1} parent=1 // pred_region
      _
    $region29: #{tpu_custom_call.1} parent=1 // pred_fallthru
      _
    // Predicated region
    $region30: #{tpu_custom_call.1} parent=1 // pred_check
      _
    $region31: #{tpu_custom_call.1} parent=1 // pred_check_branch
      %60 = sbr.rel (0) target = $region33
    $region32: #{tpu_custom_call.1} parent=1 // pred_region
      %61 = dma.done [#allocation3], 256
    $region33: #{tpu_custom_call.1} parent=1 // pred_fallthru
      _
    // Predicated region
    $region34: #{tpu_custom_call.1} parent=1 // pred_check
      _
    $region35: #{tpu_custom_call.1} parent=1 // pred_check_branch
      %63 = sbr.rel (0) target = $region37
    $region36: #{tpu_custom_call.1} parent=1 // pred_region
      %64 = dma.done [#allocation6], 4096
    $region37: #{tpu_custom_call.1} parent=1 // pred_fallthru
      _
    // Predicated region
    $region38: #{tpu_custom_call.1} parent=1 // pred_check
      _
    $region39: #{tpu_custom_call.1} parent=1 // pred_check_branch
      %66 = sbr.rel (0) target = $region41
    $region40: #{tpu_custom_call.1} parent=1 // pred_region
      %67 = dma.done [#allocation6], 4096
    $region41: #{tpu_custom_call.1} parent=1 // pred_fallthru
      _
    %v69 = vld [vmem:[#allocation2] sm:$0xff]
    %v70 = vld [vmem:[#allocation2 + $0x8] sm:$0xff]
    %v71 = vpack.c.bf16 %v70, %v69
    %v72 = vld [vmem:[#allocation5] sm:$0xff]
    %v73 = vld [vmem:[#allocation5 + $0x8] sm:$0xff]
    %v74 = vld [vmem:[#allocation5 + $0x10] sm:$0xff]
    %v75 = vld [vmem:[#allocation5 + $0x18] sm:$0xff]
    %v76 = vld [vmem:[#allocation5 + $0x20] sm:$0xff]
    %v77 = vld [vmem:[#allocation5 + $0x28] sm:$0xff]
    %v78 = vld [vmem:[#allocation5 + $0x30] sm:$0xff]
    %v79 = vld [vmem:[#allocation5 + $0x38] sm:$0xff]
    %v80 = vld [vmem:[#allocation5 + $0x40] sm:$0xff]
    %v81 = vld [vmem:[#allocation5 + $0x48] sm:$0xff]
    %v82 = vld [vmem:[#allocation5 + $0x50] sm:$0xff]
    %v83 = vld [vmem:[#allocation5 + $0x58] sm:$0xff]
    %v84 = vld [vmem:[#allocation5 + $0x60] sm:$0xff]
    %v85 = vld [vmem:[#allocation5 + $0x68] sm:$0xff]
    %v86 = vld [vmem:[#allocation5 + $0x70] sm:$0xff]
    %v87 = vld [vmem:[#allocation5 + $0x78] sm:$0xff]
    %v88 = vld [vmem:[#allocation5 + $0x80] sm:$0xff]
    %v89 = vld [vmem:[#allocation5 + $0x88] sm:$0xff]
    %v90 = vld [vmem:[#allocation5 + $0x90] sm:$0xff]
    %v91 = vld [vmem:[#allocation5 + $0x98] sm:$0xff]
    %v92 = vld [vmem:[#allocation5 + $0xa0] sm:$0xff]
    %v93 = vld [vmem:[#allocation5 + $0xa8] sm:$0xff]
    %v94 = vld [vmem:[#allocation5 + $0xb0] sm:$0xff]
    %v95 = vld [vmem:[#allocation5 + $0xb8] sm:$0xff]
    %v96 = vld [vmem:[#allocation5 + $0xc0] sm:$0xff]
    %v97 = vld [vmem:[#allocation5 + $0xc8] sm:$0xff]
    %v98 = vld [vmem:[#allocation5 + $0xd0] sm:$0xff]
    %v99 = vld [vmem:[#allocation5 + $0xd8] sm:$0xff]
    %v100 = vld [vmem:[#allocation5 + $0xe0] sm:$0xff]
    %v101 = vld [vmem:[#allocation5 + $0xe8] sm:$0xff]
    %v102 = vld [vmem:[#allocation5 + $0xf0] sm:$0xff]
    %v103 = vld [vmem:[#allocation5 + $0xf8] sm:$0xff]
    %v104 = vld [vmem:[%s2] sm:$0xf]
    %v106 = vlaneseq
    %v107 = vshrl.u32 %v106, 7
    %v108 = vsub.s32 0, %v107
    %v109 = vrot.slane %v104, %v108
    %v110 = vlaneseq
    %v111 = vshrl.u32 %v110, 7
    %v112 = vsub.s32 1, %v111
    %v113 = vrot.slane %v104, %v112
    %v114 = vlaneseq
    %v115 = vshrl.u32 %v114, 7
    %v116 = vsub.s32 2, %v115
    %v117 = vrot.slane %v104, %v116
    %v118 = vlaneseq
    %v119 = vshrl.u32 %v118, 7
    %v120 = vsub.s32 3, %v119
    %v121 = vrot.slane %v104, %v120
    %v158 = vunpack.c.l.b16 %v72
    %v159 = vunpack.c.h.b16 %v72
    %v160 = vunpack.c.l.b16 %v73
    %v161 = vunpack.c.h.b16 %v73
    %v162 = vunpack.c.l.b16 %v74
    %v163 = vunpack.c.h.b16 %v74
    %v164 = vunpack.c.l.b16 %v75
    %v165 = vunpack.c.h.b16 %v75
    %v166 = vunpack.c.l.b16 %v76
    %v167 = vunpack.c.h.b16 %v76
    %v168 = vunpack.c.l.b16 %v77
    %v169 = vunpack.c.h.b16 %v77
    %v170 = vunpack.c.l.b16 %v78
    %v171 = vunpack.c.h.b16 %v78
    %v172 = vunpack.c.l.b16 %v79
    %v173 = vunpack.c.h.b16 %v79
    %v174 = vunpack.c.l.b16 %v80
    %v175 = vunpack.c.h.b16 %v80
    %v176 = vunpack.c.l.b16 %v81
    %v177 = vunpack.c.h.b16 %v81
    %v178 = vunpack.c.l.b16 %v82
    %v179 = vunpack.c.h.b16 %v82
    %v180 = vunpack.c.l.b16 %v83
    %v181 = vunpack.c.h.b16 %v83
    %v182 = vunpack.c.l.b16 %v84
    %v183 = vunpack.c.h.b16 %v84
    %v184 = vunpack.c.l.b16 %v85
    %v185 = vunpack.c.h.b16 %v85
    %v186 = vunpack.c.l.b16 %v86
    %v187 = vunpack.c.h.b16 %v86
    %v188 = vunpack.c.l.b16 %v87
    %v189 = vunpack.c.h.b16 %v87
    %v190 = vunpack.c.l.b16 %v88
    %v191 = vunpack.c.h.b16 %v88
    %v192 = vunpack.c.l.b16 %v89
    %v193 = vunpack.c.h.b16 %v89
    %v194 = vunpack.c.l.b16 %v90
    %v195 = vunpack.c.h.b16 %v90
    %v196 = vunpack.c.l.b16 %v91
    %v197 = vunpack.c.h.b16 %v91
    %v198 = vunpack.c.l.b16 %v92
    %v199 = vunpack.c.h.b16 %v92
    %v200 = vunpack.c.l.b16 %v93
    %v201 = vunpack.c.h.b16 %v93
    %v202 = vunpack.c.l.b16 %v94
    %v203 = vunpack.c.h.b16 %v94
    %v204 = vunpack.c.l.b16 %v95
    %v205 = vunpack.c.h.b16 %v95
    %v206 = vunpack.c.l.b16 %v96
    %v207 = vunpack.c.h.b16 %v96
    %v208 = vunpack.c.l.b16 %v97
    %v209 = vunpack.c.h.b16 %v97
    %v210 = vunpack.c.l.b16 %v98
    %v211 = vunpack.c.h.b16 %v98
    %v212 = vunpack.c.l.b16 %v99
    %v213 = vunpack.c.h.b16 %v99
    %v214 = vunpack.c.l.b16 %v100
    %v215 = vunpack.c.h.b16 %v100
    %v216 = vunpack.c.l.b16 %v101
    %v217 = vunpack.c.h.b16 %v101
    %v218 = vunpack.c.l.b16 %v102
    %v219 = vunpack.c.h.b16 %v102
    %v220 = vunpack.c.l.b16 %v103
    %v221 = vunpack.c.h.b16 %v103
    %v222 = vpack.c.b16 %v162, %v158
    %v223 = vpack.c.b16 %v163, %v159
    %v224 = vpack.c.b16 %v164, %v160
    %v225 = vpack.c.b16 %v165, %v161
    %v226 = vpack.c.b16 %v170, %v166
    %v227 = vpack.c.b16 %v171, %v167
    %v228 = vpack.c.b16 %v172, %v168
    %v229 = vpack.c.b16 %v173, %v169
    %v230 = vpack.c.b16 %v178, %v174
    %v231 = vpack.c.b16 %v179, %v175
    %v232 = vpack.c.b16 %v180, %v176
    %v233 = vpack.c.b16 %v181, %v177
    %v234 = vpack.c.b16 %v186, %v182
    %v235 = vpack.c.b16 %v187, %v183
    %v236 = vpack.c.b16 %v188, %v184
    %v237 = vpack.c.b16 %v189, %v185
    %v238 = vpack.c.b16 %v194, %v190
    %v239 = vpack.c.b16 %v195, %v191
    %v240 = vpack.c.b16 %v196, %v192
    %v241 = vpack.c.b16 %v197, %v193
    %v242 = vpack.c.b16 %v202, %v198
    %v243 = vpack.c.b16 %v203, %v199
    %v244 = vpack.c.b16 %v204, %v200
    %v245 = vpack.c.b16 %v205, %v201
    %v246 = vpack.c.b16 %v210, %v206
    %v247 = vpack.c.b16 %v211, %v207
    %v248 = vpack.c.b16 %v212, %v208
    %v249 = vpack.c.b16 %v213, %v209
    %v250 = vpack.c.b16 %v218, %v214
    %v251 = vpack.c.b16 %v219, %v215
    %v252 = vpack.c.b16 %v220, %v216
    %v253 = vpack.c.b16 %v221, %v217
    %286 = vmatprep.subr.bf16.mxu0 %v223
    %287 = vmatpush1.bf16.msra.mxu0 %v222
    %288 = vmatprep.subr.bf16.mxu0 %v227
    %289 = vmatpush1.bf16.msra.mxu0 %v226
    %290 = vmatprep.subr.bf16.mxu0 %v231
    %291 = vmatpush1.bf16.msra.mxu0 %v230
    %292 = vmatprep.subr.bf16.mxu0 %v235
    %293 = vmatpush1.bf16.msra.mxu0 %v234
    %294 = vmatprep.subr.bf16.mxu0 %v239
    %295 = vmatpush1.bf16.msra.mxu0 %v238
    %296 = vmatprep.subr.bf16.mxu0 %v243
    %297 = vmatpush1.bf16.msra.mxu0 %v242
    %298 = vmatprep.subr.bf16.mxu0 %v247
    %299 = vmatpush1.bf16.msra.mxu0 %v246
    %300 = vmatprep.subr.bf16.mxu0 %v251
    %301 = vmatpush1.bf16.msra.mxu0 %v250
    %302 = vmatprep.subr.bf16.mxu0 0
    %303 = vmatpush1.bf16.msra.mxu0 0
    %304 = vmatprep.subr.bf16.mxu0 0
    %305 = vmatpush1.bf16.msra.mxu0 0
    %306 = vmatprep.subr.bf16.mxu0 0
    %307 = vmatpush1.bf16.msra.mxu0 0
    %308 = vmatprep.subr.bf16.mxu0 0
    %309 = vmatpush1.bf16.msra.mxu0 0
    %310 = vmatprep.subr.bf16.mxu0 0
    %311 = vmatpush1.bf16.msra.mxu0 0
    %312 = vmatprep.subr.bf16.mxu0 0
    %313 = vmatpush1.bf16.msra.mxu0 0
    %314 = vmatprep.subr.bf16.mxu0 0
    %315 = vmatpush1.bf16.msra.mxu0 0
    %316 = vmatprep.subr.bf16.mxu0 0
    %317 = vmatpush1.bf16.msra.mxu0 0
    %318 = vmatprep.mubr.bf16.mxu0 0
    %319 = vmatmul.mubr.bf16.gmra.mrb[0].mxu0 %v71
    %v320 = vpop.f32.mrb[0].mxu0
    %v321 = vadd.f32 %v109, %v320
    %v322 = vpop.f32.mrb[0].mxu0
    %v323 = vadd.f32 %v113, %v322
    %v324 = vpop.f32.mrb[0].mxu0
    %v325 = vadd.f32 %v109, %v324
    %v326 = vpop.f32.mrb[0].mxu0
    %v327 = vadd.f32 %v113, %v326
    %328 = vdwg.mxu0
    %329 = vmatprep.subr.bf16.mxu0 %v225
    %330 = vmatpush1.bf16.msra.mxu0 %v224
    %331 = vmatprep.subr.bf16.mxu0 %v229
    %332 = vmatpush1.bf16.msra.mxu0 %v228
    %333 = vmatprep.subr.bf16.mxu0 %v233
    %334 = vmatpush1.bf16.msra.mxu0 %v232
    %335 = vmatprep.subr.bf16.mxu0 %v237
    %336 = vmatpush1.bf16.msra.mxu0 %v236
    %337 = vmatprep.subr.bf16.mxu0 %v241
    %338 = vmatpush1.bf16.msra.mxu0 %v240
    %339 = vmatprep.subr.bf16.mxu0 %v245
    %340 = vmatpush1.bf16.msra.mxu0 %v244
    %341 = vmatprep.subr.bf16.mxu0 %v249
    %342 = vmatpush1.bf16.msra.mxu0 %v248
    %343 = vmatprep.subr.bf16.mxu0 %v253
    %344 = vmatpush1.bf16.msra.mxu0 %v252
    %345 = vmatprep.subr.bf16.mxu0 0
    %346 = vmatpush1.bf16.msra.mxu0 0
    %347 = vmatprep.subr.bf16.mxu0 0
    %348 = vmatpush1.bf16.msra.mxu0 0
    %349 = vmatprep.subr.bf16.mxu0 0
    %350 = vmatpush1.bf16.msra.mxu0 0
    %351 = vmatprep.subr.bf16.mxu0 0
    %352 = vmatpush1.bf16.msra.mxu0 0
    %353 = vmatprep.subr.bf16.mxu0 0
    %354 = vmatpush1.bf16.msra.mxu0 0
    %355 = vmatprep.subr.bf16.mxu0 0
    %356 = vmatpush1.bf16.msra.mxu0 0
    %357 = vmatprep.subr.bf16.mxu0 0
    %358 = vmatpush1.bf16.msra.mxu0 0
    %359 = vmatprep.subr.bf16.mxu0 0
    %360 = vmatpush1.bf16.msra.mxu0 0
    %361 = vmatprep.mubr.bf16.mxu0 0
    %362 = vmatmul.mubr.bf16.gmra.mrb[0].mxu0 %v71
    %v363 = vpop.f32.mrb[0].mxu0
    %v364 = vadd.f32 %v117, %v363
    %v365 = vpop.f32.mrb[0].mxu0
    %v366 = vadd.f32 %v121, %v365
    %v367 = vpop.f32.mrb[0].mxu0
    %v368 = vadd.f32 %v117, %v367
    %v369 = vpop.f32.mrb[0].mxu0
    %v370 = vadd.f32 %v121, %v369
    %371 = vdwg.mxu0
    %v372 = vmax.f32 %v321, 0.0
    %v373 = vmax.f32 %v323, 0.0
    %v374 = vmax.f32 %v364, 0.0
    %v375 = vmax.f32 %v366, 0.0
    %v376 = vmax.f32 %v325, 0.0
    %v377 = vmax.f32 %v327, 0.0
    %v378 = vmax.f32 %v368, 0.0
    %v379 = vmax.f32 %v370, 0.0
    %v380 = vpack.c.bf16 %v376, %v372
    %v381 = vpack.c.bf16 %v377, %v373
    %v382 = vpack.c.bf16 %v378, %v374
    %v383 = vpack.c.bf16 %v379, %v375
    %v384 = vld [vmem:[#allocation7] sm:$0xf]
    %v385 = vld [vmem:[#allocation7 + $0x4] sm:$0xf]
    %v386 = vld [vmem:[#allocation7 + $0x8] sm:$0xf]
    %v387 = vld [vmem:[#allocation7 + $0xc] sm:$0xf]
    %v388 = vld [vmem:[#allocation7 + $0x10] sm:$0xf]
    %v389 = vld [vmem:[#allocation7 + $0x14] sm:$0xf]
    %v390 = vld [vmem:[#allocation7 + $0x18] sm:$0xf]
    %v391 = vld [vmem:[#allocation7 + $0x1c] sm:$0xf]
    %v392 = vld [vmem:[#allocation7 + $0x20] sm:$0xf]
    %v393 = vld [vmem:[#allocation7 + $0x24] sm:$0xf]
    %v394 = vld [vmem:[#allocation7 + $0x28] sm:$0xf]
    %v395 = vld [vmem:[#allocation7 + $0x2c] sm:$0xf]
    %v396 = vld [vmem:[#allocation7 + $0x30] sm:$0xf]
    %v397 = vld [vmem:[#allocation7 + $0x34] sm:$0xf]
    %v398 = vld [vmem:[#allocation7 + $0x38] sm:$0xf]
    %v399 = vld [vmem:[#allocation7 + $0x3c] sm:$0xf]
    %v400 = vld [vmem:[#allocation7 + $0x40] sm:$0xf]
    %v401 = vld [vmem:[#allocation7 + $0x44] sm:$0xf]
    %v402 = vld [vmem:[#allocation7 + $0x48] sm:$0xf]
    %v403 = vld [vmem:[#allocation7 + $0x4c] sm:$0xf]
    %v404 = vld [vmem:[#allocation7 + $0x50] sm:$0xf]
    %v405 = vld [vmem:[#allocation7 + $0x54] sm:$0xf]
    %v406 = vld [vmem:[#allocation7 + $0x58] sm:$0xf]
    %v407 = vld [vmem:[#allocation7 + $0x5c] sm:$0xf]
    %v408 = vld [vmem:[#allocation7 + $0x60] sm:$0xf]
    %v409 = vld [vmem:[#allocation7 + $0x64] sm:$0xf]
    %v410 = vld [vmem:[#allocation7 + $0x68] sm:$0xf]
    %v411 = vld [vmem:[#allocation7 + $0x6c] sm:$0xf]
    %v412 = vld [vmem:[#allocation7 + $0x70] sm:$0xf]
    %v413 = vld [vmem:[#allocation7 + $0x74] sm:$0xf]
    %v414 = vld [vmem:[#allocation7 + $0x78] sm:$0xf]
    %v415 = vld [vmem:[#allocation7 + $0x7c] sm:$0xf]
    %v416 = vld [vmem:[#allocation7 + $0x80] sm:$0xf]
    %v417 = vld [vmem:[#allocation7 + $0x84] sm:$0xf]
    %v418 = vld [vmem:[#allocation7 + $0x88] sm:$0xf]
    %v419 = vld [vmem:[#allocation7 + $0x8c] sm:$0xf]
    %v420 = vld [vmem:[#allocation7 + $0x90] sm:$0xf]
    %v421 = vld [vmem:[#allocation7 + $0x94] sm:$0xf]
    %v422 = vld [vmem:[#allocation7 + $0x98] sm:$0xf]
    %v423 = vld [vmem:[#allocation7 + $0x9c] sm:$0xf]
    %v424 = vld [vmem:[#allocation7 + $0xa0] sm:$0xf]
    %v425 = vld [vmem:[#allocation7 + $0xa4] sm:$0xf]
    %v426 = vld [vmem:[#allocation7 + $0xa8] sm:$0xf]
    %v427 = vld [vmem:[#allocation7 + $0xac] sm:$0xf]
    %v428 = vld [vmem:[#allocation7 + $0xb0] sm:$0xf]
    %v429 = vld [vmem:[#allocation7 + $0xb4] sm:$0xf]
    %v430 = vld [vmem:[#allocation7 + $0xb8] sm:$0xf]
    %v431 = vld [vmem:[#allocation7 + $0xbc] sm:$0xf]
    %v432 = vld [vmem:[#allocation7 + $0xc0] sm:$0xf]
    %v433 = vld [vmem:[#allocation7 + $0xc4] sm:$0xf]
    %v434 = vld [vmem:[#allocation7 + $0xc8] sm:$0xf]
    %v435 = vld [vmem:[#allocation7 + $0xcc] sm:$0xf]
    %v436 = vld [vmem:[#allocation7 + $0xd0] sm:$0xf]
    %v437 = vld [vmem:[#allocation7 + $0xd4] sm:$0xf]
    %v438 = vld [vmem:[#allocation7 + $0xd8] sm:$0xf]
    %v439 = vld [vmem:[#allocation7 + $0xdc] sm:$0xf]
    %v440 = vld [vmem:[#allocation7 + $0xe0] sm:$0xf]
    %v441 = vld [vmem:[#allocation7 + $0xe4] sm:$0xf]
    %v442 = vld [vmem:[#allocation7 + $0xe8] sm:$0xf]
    %v443 = vld [vmem:[#allocation7 + $0xec] sm:$0xf]
    %v444 = vld [vmem:[#allocation7 + $0xf0] sm:$0xf]
    %v445 = vld [vmem:[#allocation7 + $0xf4] sm:$0xf]
    %v446 = vld [vmem:[#allocation7 + $0xf8] sm:$0xf]
    %v447 = vld [vmem:[#allocation7 + $0xfc] sm:$0xf]
    %v448 = vld [vmem:[%s4] sm:$0x1]
    %v450 = vlaneseq
    %v451 = vshrl.u32 %v450, 7
    %v452 = vsub.s32 0, %v451
    %v453 = vrot.slane %v448, %v452
    %v519 = vunpack.c.l.b16 %v384
    %v520 = vunpack.c.l.b16 %v385
    %v521 = vunpack.c.l.b16 %v386
    %v522 = vunpack.c.l.b16 %v387
    %v523 = vunpack.c.l.b16 %v388
    %v524 = vunpack.c.l.b16 %v389
    %v525 = vunpack.c.l.b16 %v390
    %v526 = vunpack.c.l.b16 %v391
    %v527 = vunpack.c.l.b16 %v392
    %v528 = vunpack.c.l.b16 %v393
    %v529 = vunpack.c.l.b16 %v394
    %v530 = vunpack.c.l.b16 %v395
    %v531 = vunpack.c.l.b16 %v396
    %v532 = vunpack.c.l.b16 %v397
    %v533 = vunpack.c.l.b16 %v398
    %v534 = vunpack.c.l.b16 %v399
    %v535 = vunpack.c.l.b16 %v400
    %v536 = vunpack.c.l.b16 %v401
    %v537 = vunpack.c.l.b16 %v402
    %v538 = vunpack.c.l.b16 %v403
    %v539 = vunpack.c.l.b16 %v404
    %v540 = vunpack.c.l.b16 %v405
    %v541 = vunpack.c.l.b16 %v406
    %v542 = vunpack.c.l.b16 %v407
    %v543 = vunpack.c.l.b16 %v408
    %v544 = vunpack.c.l.b16 %v409
    %v545 = vunpack.c.l.b16 %v410
    %v546 = vunpack.c.l.b16 %v411
    %v547 = vunpack.c.l.b16 %v412
    %v548 = vunpack.c.l.b16 %v413
    %v549 = vunpack.c.l.b16 %v414
    %v550 = vunpack.c.l.b16 %v415
    %v551 = vunpack.c.l.b16 %v416
    %v552 = vunpack.c.l.b16 %v417
    %v553 = vunpack.c.l.b16 %v418
    %v554 = vunpack.c.l.b16 %v419
    %v555 = vunpack.c.l.b16 %v420
    %v556 = vunpack.c.l.b16 %v421
    %v557 = vunpack.c.l.b16 %v422
    %v558 = vunpack.c.l.b16 %v423
    %v559 = vunpack.c.l.b16 %v424
    %v560 = vunpack.c.l.b16 %v425
    %v561 = vunpack.c.l.b16 %v426
    %v562 = vunpack.c.l.b16 %v427
    %v563 = vunpack.c.l.b16 %v428
    %v564 = vunpack.c.l.b16 %v429
    %v565 = vunpack.c.l.b16 %v430
    %v566 = vunpack.c.l.b16 %v431
    %v567 = vunpack.c.l.b16 %v432
    %v568 = vunpack.c.l.b16 %v433
    %v569 = vunpack.c.l.b16 %v434
    %v570 = vunpack.c.l.b16 %v435
    %v571 = vunpack.c.l.b16 %v436
    %v572 = vunpack.c.l.b16 %v437
    %v573 = vunpack.c.l.b16 %v438
    %v574 = vunpack.c.l.b16 %v439
    %v575 = vunpack.c.l.b16 %v440
    %v576 = vunpack.c.l.b16 %v441
    %v577 = vunpack.c.l.b16 %v442
    %v578 = vunpack.c.l.b16 %v443
    %v579 = vunpack.c.l.b16 %v444
    %v580 = vunpack.c.l.b16 %v445
    %v581 = vunpack.c.l.b16 %v446
    %v582 = vunpack.c.l.b16 %v447
    %v583 = vpack.c.b16 %v520, %v519
    %v584 = vpack.c.b16 %v522, %v521
    %v585 = vpack.c.b16 %v524, %v523
    %v586 = vpack.c.b16 %v526, %v525
    %v587 = vpack.c.b16 %v528, %v527
    %v588 = vpack.c.b16 %v530, %v529
    %v589 = vpack.c.b16 %v532, %v531
    %v590 = vpack.c.b16 %v534, %v533
    %v591 = vpack.c.b16 %v536, %v535
    %v592 = vpack.c.b16 %v538, %v537
    %v593 = vpack.c.b16 %v540, %v539
    %v594 = vpack.c.b16 %v542, %v541
    %v595 = vpack.c.b16 %v544, %v543
    %v596 = vpack.c.b16 %v546, %v545
    %v597 = vpack.c.b16 %v548, %v547
    %v598 = vpack.c.b16 %v550, %v549
    %v599 = vpack.c.b16 %v552, %v551
    %v600 = vpack.c.b16 %v554, %v553
    %v601 = vpack.c.b16 %v556, %v555
    %v602 = vpack.c.b16 %v558, %v557
    %v603 = vpack.c.b16 %v560, %v559
    %v604 = vpack.c.b16 %v562, %v561
    %v605 = vpack.c.b16 %v564, %v563
    %v606 = vpack.c.b16 %v566, %v565
    %v607 = vpack.c.b16 %v568, %v567
    %v608 = vpack.c.b16 %v570, %v569
    %v609 = vpack.c.b16 %v572, %v571
    %v610 = vpack.c.b16 %v574, %v573
    %v611 = vpack.c.b16 %v576, %v575
    %v612 = vpack.c.b16 %v578, %v577
    %v613 = vpack.c.b16 %v580, %v579
    %v614 = vpack.c.b16 %v582, %v581
    %647 = vmatprep.subr.bf16.mxu0 0
    %648 = vmatpush1.bf16.msra.mxu0 %v583
    %649 = vmatprep.subr.bf16.mxu0 0
    %650 = vmatpush1.bf16.msra.mxu0 %v584
    %651 = vmatprep.subr.bf16.mxu0 0
    %652 = vmatpush1.bf16.msra.mxu0 %v585
    %653 = vmatprep.subr.bf16.mxu0 0
    %654 = vmatpush1.bf16.msra.mxu0 %v586
    %655 = vmatprep.subr.bf16.mxu0 0
    %656 = vmatpush1.bf16.msra.mxu0 %v587
    %657 = vmatprep.subr.bf16.mxu0 0
    %658 = vmatpush1.bf16.msra.mxu0 %v588
    %659 = vmatprep.subr.bf16.mxu0 0
    %660 = vmatpush1.bf16.msra.mxu0 %v589
    %661 = vmatprep.subr.bf16.mxu0 0
    %662 = vmatpush1.bf16.msra.mxu0 %v590
    %663 = vmatprep.subr.bf16.mxu0 0
    %664 = vmatpush1.bf16.msra.mxu0 %v591
    %665 = vmatprep.subr.bf16.mxu0 0
    %666 = vmatpush1.bf16.msra.mxu0 %v592
    %667 = vmatprep.subr.bf16.mxu0 0
    %668 = vmatpush1.bf16.msra.mxu0 %v593
    %669 = vmatprep.subr.bf16.mxu0 0
    %670 = vmatpush1.bf16.msra.mxu0 %v594
    %671 = vmatprep.subr.bf16.mxu0 0
    %672 = vmatpush1.bf16.msra.mxu0 %v595
    %673 = vmatprep.subr.bf16.mxu0 0
    %674 = vmatpush1.bf16.msra.mxu0 %v596
    %675 = vmatprep.subr.bf16.mxu0 0
    %676 = vmatpush1.bf16.msra.mxu0 %v597
    %677 = vmatprep.subr.bf16.mxu0 0
    %678 = vmatpush1.bf16.msra.mxu0 %v598
    %679 = vmatprep.mubr.bf16.mxu0 %v381
    %680 = vmatmul.mubr.bf16.gmra.mrb[0].mxu0 %v380
    %v681 = vpop.f32.mrb[0].mxu0
    %v682 = vadd.f32 %v453, %v681
    %v683 = vpop.f32.mrb[0].mxu0
    %v684 = vpop.f32.mrb[0].mxu0
    %v685 = vadd.f32 %v453, %v684
    %v686 = vpop.f32.mrb[0].mxu0
    %687 = vdwg.mxu0
    %688 = vmatprep.subr.bf16.mxu0 0
    %689 = vmatpush1.bf16.msra.mxu0 %v599
    %690 = vmatprep.subr.bf16.mxu0 0
    %691 = vmatpush1.bf16.msra.mxu0 %v600
    %692 = vmatprep.subr.bf16.mxu0 0
    %693 = vmatpush1.bf16.msra.mxu0 %v601
    %694 = vmatprep.subr.bf16.mxu0 0
    %695 = vmatpush1.bf16.msra.mxu0 %v602
    %696 = vmatprep.subr.bf16.mxu0 0
    %697 = vmatpush1.bf16.msra.mxu0 %v603
    %698 = vmatprep.subr.bf16.mxu0 0
    %699 = vmatpush1.bf16.msra.mxu0 %v604
    %700 = vmatprep.subr.bf16.mxu0 0
    %701 = vmatpush1.bf16.msra.mxu0 %v605
    %702 = vmatprep.subr.bf16.mxu0 0
    %703 = vmatpush1.bf16.msra.mxu0 %v606
    %704 = vmatprep.subr.bf16.mxu0 0
    %705 = vmatpush1.bf16.msra.mxu0 %v607
    %706 = vmatprep.subr.bf16.mxu0 0
    %707 = vmatpush1.bf16.msra.mxu0 %v608
    %708 = vmatprep.subr.bf16.mxu0 0
    %709 = vmatpush1.bf16.msra.mxu0 %v609
    %710 = vmatprep.subr.bf16.mxu0 0
    %711 = vmatpush1.bf16.msra.mxu0 %v610
    %712 = vmatprep.subr.bf16.mxu0 0
    %713 = vmatpush1.bf16.msra.mxu0 %v611
    %714 = vmatprep.subr.bf16.mxu0 0
    %715 = vmatpush1.bf16.msra.mxu0 %v612
    %716 = vmatprep.subr.bf16.mxu0 0
    %717 = vmatpush1.bf16.msra.mxu0 %v613
    %718 = vmatprep.subr.bf16.mxu0 0
    %719 = vmatpush1.bf16.msra.mxu0 %v614
    %720 = vmatprep.mubr.bf16.mxu0 %v383
    %721 = vmatmul.mubr.bf16.gmra.mrb[0].mxu0 %v382
    %v722 = vpop.f32.mrb[0].mxu0
    %v723 = vadd.f32 %v682, %v722
    %v724 = vpop.f32.mrb[0].mxu0
    %v725 = vpop.f32.mrb[0].mxu0
    %v726 = vadd.f32 %v685, %v725
    %v727 = vpop.f32.mrb[0].mxu0
    %728 = vdwg.mxu0
    %v729 = vadd.f32 %v723, %v69
    %v730 = vadd.f32 %v726, %v70
    %v731 = vld [vmem:[%s5] sm:$0x1]
    %v732 = vld [vmem:[%s6] sm:$0x1]
    %733 = vadd.xlane.f32.xlu0 %v729
    %v734 = vpop.xlane.xlu0 %733
    %735 = vadd.xlane.f32.xlu0 %v730
    %v736 = vpop.xlane.xlu0 %735
    %v737 = vrcp.pop 128.0
    %v738 = vmul.f32 %v734, %v737
    %v739 = vmul.f32 %v736, %v737
    %v740 = vsub.f32 %v729, %v738
    %v741 = vsub.f32 %v730, %v739
    %v742 = vmul.f32 %v740, %v740
    %v743 = vmul.f32 %v741, %v741
    %744 = vadd.xlane.f32.xlu0 %v742
    %v745 = vpop.xlane.xlu0 %744
    %746 = vadd.xlane.f32.xlu0 %v743
    %v747 = vpop.xlane.xlu0 %746
    %v748 = vmul.f32 %v745, %v737
    %v749 = vmul.f32 %v747, %v737
    %v750 = vadd.f32 %v748, 1e-05
    %v751 = vadd.f32 %v749, 1e-05
    %v752 = vrsqrt.pop %v750
    %v753 = vrsqrt.pop %v751
    %v754 = vmul.f32 %v740, %v752
    %v755 = vmul.f32 %v741, %v753
    %v757 = vlaneseq
    %v758 = vshrl.u32 %v757, 7
    %v759 = vsub.s32 0, %v758
    %v760 = vrot.slane %v731, %v759
    %v762 = vmul.f32 %v754, %v760
    %v763 = vmul.f32 %v755, %v760
    %v765 = vlaneseq
    %v766 = vshrl.u32 %v765, 7
    %v767 = vsub.s32 0, %v766
    %v768 = vrot.slane %v732, %v767
    %v770 = vadd.f32 %v762, %v768
    %v771 = vadd.f32 %v763, %v768
    %772 = vst [vmem:[#allocation8] sm:$0xff] %v770
    %773 = vst [vmem:[#allocation8 + $0x8] sm:$0xff] %v771
    // Predicated region
    $region42: #{tpu_custom_call.1} parent=1 // pred_check
      _
    $region43: #{tpu_custom_call.1} parent=1 // pred_check_branch
      %775 = sbr.rel (0) target = $region45
    $region44: #{tpu_custom_call.1} parent=1 // pred_region
      %s777 = ssub.s32 256, 256
      %778 = vsyncadd [#allocation4], %s777
      %s779 = sshll.u32 [#allocation8], 4
      %s780 = int_to_ptr.vmem [resolvable:$true] %s779
      %785 = dma.vmem_to_hbm [thread:$0]  %s780, 256, %s7, [#allocation4], 128, 128, 8
    $region45: #{tpu_custom_call.1} parent=1 // pred_fallthru
      _
    // Predicated region
    $region46: #{tpu_custom_call.1} parent=1 // pred_check
      _
    $region47: #{tpu_custom_call.1} parent=1 // pred_check_branch
      %787 = sbr.rel (0) target = $region49
    $region48: #{tpu_custom_call.1} parent=1 // pred_region
      %788 = dma.done [#allocation4], 256
    $region49: #{tpu_custom_call.1} parent=1 // pred_fallthru
      _
    %789 = vsyncpa [#allocation3], 1
    %790 = vsyncpa [#allocation6], 1
    %791 = vsyncpa [#allocation4], 1

</llo_original>
